<compile_context>
chip_gen: v5e
topology: v5e:2x2
jax: 0.10.0
libtpu: 0.0.40
codegen_flags: <defaults>
</compile_context>

<pallas_src>
import jax
import jax.numpy as jnp
from jax.experimental import pallas as pl
from jax.experimental.pallas import tpu as pltpu

_SUBLANE = 8  # f32 sublane count


def _mlp_kernel(x_ref,
                w_in_ref, b_in_ref,
                w0_ref, b0_ref,
                w1_ref, b1_ref,
                w2_ref, b2_ref,
                w3_ref, b3_ref,
                out_ref):
    """Fused 5-layer MLP (matmul + bias + relu chain) on one batch tile."""

    def dense(a, w_ref, b_ref, relu):
        w = w_ref[...]
        # MXU feed in w.dtype (bf16 by default), f32 accumulation.
        z = jnp.dot(a.astype(w.dtype), w, preferred_element_type=jnp.float32)
        z = z + b_ref[...]                 # bias is (1, N) f32 -> broadcast
        return jnp.maximum(z, 0.0) if relu else z

    h = dense(x_ref[...], w_in_ref, b_in_ref, True)   # inlayer + relu
    h = dense(h, w0_ref, b0_ref, True)                # dvn[0] + relu
    h = dense(h, w1_ref, b1_ref, True)                # dvn[2] + relu
    h = dense(h, w2_ref, b2_ref, True)                # dvn[4] + relu
    # Dropout (dvn[6]) is identity at inference time.
    # TODO(synk): training-mode dropout (pltpu.prng_random_bits mask) not implemented.
    y = dense(h, w3_ref, b3_ref, False)               # dvn[7] (no relu)
    out_ref[...] = y.astype(out_ref.dtype)


def _round_up(n, m):
    return ((n + m - 1) // m) * m


def _cdiv(a, b):
    return -(-a // b)


def prepare_params(params, compute_dtype=jnp.bfloat16):
    """One-time parameter preparation (call ONCE, outside the forward).

    Casts weights to the MXU feed dtype and reshapes biases to (1, N) f32.
    Weights are expected as [in, out] (i.e. PyTorch weight.T).
    """
    flat = []
    for name in ("in", "d0", "d1", "d2", "d3"):
        w = jnp.asarray(params[f"w_{name}"]).astype(compute_dtype)
        b = jnp.asarray(params[f"b_{name}"]).astype(jnp.float32).reshape(1, -1)
        flat.extend([w, b])
    return tuple(flat)


def _choose_bm(batch, block_m):
    """Balanced batch tile: multiple of 8 rows, minimal zero-row padding,
    and >=2 tiles for sizable batches so v7x's two TensorCores both get work
    (the batch grid axis is marked "parallel")."""
    n_tiles = max(1, _cdiv(batch, block_m))
    if n_tiles == 1 and batch >= 256:
        n_tiles = 2
    return _round_up(max(_cdiv(batch, n_tiles), _SUBLANE), _SUBLANE)


def nn_surrogate_forward(x, prepared_params, *, block_m=1024):
    """NNSurrogateModel forward.

    x: [batch, features] (any float dtype; cast to the MXU dtype in-kernel).
    prepared_params: output of prepare_params().
    block_m: requested batch tile (rows); balanced/clipped per _choose_bm.
    """
    B, in_dim = x.shape
    out_dim = prepared_params[-1].shape[1]   # b_d3 is (1, out_dim)

    bm = _choose_bm(B, block_m)
    B_pad = _round_up(B, bm)
    xp = x if B_pad == B else jnp.pad(x, ((0, B_pad - B), (0, 0)))

    # x: batch-tiled, real feature width (last dim == full array dim).
    in_specs = [pl.BlockSpec((bm, in_dim), lambda i: (i, 0))]
    # Weights/biases: full-array blocks, constant index -> resident across grid.
    for p in prepared_params:
        in_specs.append(pl.BlockSpec(p.shape, lambda i: (0, 0)))

    out_spec = pl.BlockSpec((bm, out_dim), lambda i: (i, 0))

    y = pl.pallas_call(
        _mlp_kernel,
        out_shape=jax.ShapeDtypeStruct((B_pad, out_dim), jnp.float32),
        grid_spec=pltpu.PrefetchScalarGridSpec(
            num_scalar_prefetch=0,
            grid=(B_pad // bm,),
            in_specs=in_specs,
            out_specs=out_spec,
        ),
        compiler_params=pltpu.CompilerParams(
            dimension_semantics=("parallel",)),
    )(xp, *prepared_params)

    return y if B_pad == B else y[:B]


def init_params(key, input_dim, hidden_dim, out_dim):
    """Deterministic synthetic init. Weights stored as [in, out]."""
    half = hidden_dim // 2
    dims = [
        ("in", input_dim, hidden_dim),
        ("d0", hidden_dim, half),
        ("d1", half, half),
        ("d2", half, half),
        ("d3", half, out_dim),
    ]
    params = {}
    for name, din, dout in dims:
        key, kw, kb = jax.random.split(key, 3)
        scale = 1.0 / jnp.sqrt(jnp.float32(din))
        params[f"w_{name}"] = jax.random.uniform(
            kw, (din, dout), jnp.float32, -scale, scale)
        params[f"b_{name}"] = jax.random.uniform(
            kb, (dout,), jnp.float32, -scale, scale)
    return params


def reference_forward(x, params):
    h = jnp.maximum(x @ params["w_in"] + params["b_in"], 0.0)
    h = jnp.maximum(h @ params["w_d0"] + params["b_d0"], 0.0)
    h = jnp.maximum(h @ params["w_d1"] + params["b_d1"], 0.0)
    h = jnp.maximum(h @ params["w_d2"] + params["b_d2"], 0.0)
    return h @ params["w_d3"] + params["b_d3"]


if __name__ == "__main__":
    batch = 8
    input_dim = 16     # input_shape[1]
    hidden_dim = 64
    out_dim = 8

    key = jax.random.PRNGKey(0)
    key, kx = jax.random.split(key)
    x = jax.random.normal(kx, (batch, input_dim), jnp.float32)
    params = init_params(key, input_dim, hidden_dim, out_dim)
    y_ref = reference_forward(x, params)

    # Default path: bf16 MXU feed (f32 accumulate / bias / ReLU).
    prepared_bf16 = prepare_params(params)                     # once, off hot path
    y = jax.block_until_ready(nn_surrogate_forward(x, prepared_bf16))
    assert y.shape == (batch, out_dim)
    assert jnp.allclose(y, y_ref, atol=3e-2, rtol=3e-2)

    # f32 path: bit-faithful check against the reference.
    prepared_f32 = prepare_params(params, compute_dtype=jnp.float32)
    y32 = jax.block_until_ready(nn_surrogate_forward(x, prepared_f32))
    assert jnp.allclose(y32, y_ref, atol=5e-4, rtol=5e-4)

    # Ragged, multi-tile batch: balanced tiles (2 x 152 rows for B=300),
    # exercises the row-padding / row-slice path and the 2-tile parallel grid.
    key, kx2 = jax.random.split(key)
    x2 = jax.random.normal(kx2, (300, input_dim), jnp.float32)
    y2 = jax.block_until_ready(nn_surrogate_forward(x2, prepared_bf16))
    assert y2.shape == (300, out_dim)
    assert jnp.allclose(y2, reference_forward(x2, params), atol=3e-2, rtol=3e-2)

    print("KERNEL_OK")
</pallas_src>

<mosaic_0001>
module attributes {stable_mosaic.version = 11 : i64} {
  func.func @_mlp_kernel(%arg0: i32, %arg1: memref<8x16xf32, #tpu.memory_space<vmem>>, %arg2: memref<16x64xbf16, #tpu.memory_space<vmem>>, %arg3: memref<1x64xf32, #tpu.memory_space<vmem>>, %arg4: memref<64x32xbf16, #tpu.memory_space<vmem>>, %arg5: memref<1x32xf32, #tpu.memory_space<vmem>>, %arg6: memref<32x32xbf16, #tpu.memory_space<vmem>>, %arg7: memref<1x32xf32, #tpu.memory_space<vmem>>, %arg8: memref<32x32xbf16, #tpu.memory_space<vmem>>, %arg9: memref<1x32xf32, #tpu.memory_space<vmem>>, %arg10: memref<32x8xbf16, #tpu.memory_space<vmem>>, %arg11: memref<1x8xf32, #tpu.memory_space<vmem>>, %arg12: memref<8x8xf32, #tpu.memory_space<vmem>>) attributes {dimension_semantics = [#tpu.dimension_semantics<parallel>], iteration_bounds = array<i64: 1>, scalar_prefetch = 0 : i64, scratch_operands = 0 : i64, tpu.core_type = #tpu.core_type<tc>, window_params = [{transform_indices = @transform_0, window_bounds = array<i64: 8, 16>}, {pipeline_mode = #tpu.pipeline_mode<synchronous>, transform_indices = @transform_1, window_bounds = array<i64: 16, 64>}, {pipeline_mode = #tpu.pipeline_mode<synchronous>, transform_indices = @transform_2, window_bounds = array<i64: 1, 64>}, {pipeline_mode = #tpu.pipeline_mode<synchronous>, transform_indices = @transform_3, window_bounds = array<i64: 64, 32>}, {pipeline_mode = #tpu.pipeline_mode<synchronous>, transform_indices = @transform_4, window_bounds = array<i64: 1, 32>}, {pipeline_mode = #tpu.pipeline_mode<synchronous>, transform_indices = @transform_5, window_bounds = array<i64: 32, 32>}, {pipeline_mode = #tpu.pipeline_mode<synchronous>, transform_indices = @transform_6, window_bounds = array<i64: 1, 32>}, {pipeline_mode = #tpu.pipeline_mode<synchronous>, transform_indices = @transform_7, window_bounds = array<i64: 32, 32>}, {pipeline_mode = #tpu.pipeline_mode<synchronous>, transform_indices = @transform_8, window_bounds = array<i64: 1, 32>}, {pipeline_mode = #tpu.pipeline_mode<synchronous>, transform_indices = @transform_9, window_bounds = array<i64: 32, 8>}, {pipeline_mode = #tpu.pipeline_mode<synchronous>, transform_indices = @transform_10, window_bounds = array<i64: 1, 8>}, {transform_indices = @transform_11, window_bounds = array<i64: 8, 8>}]} {
    %c0 = arith.constant 0 : index
    %c0_0 = arith.constant 0 : index
    %0 = vector.load %arg1[%c0, %c0_0] : memref<8x16xf32, #tpu.memory_space<vmem>>, vector<8x16xf32>
    %c0_1 = arith.constant 0 : index
    %c0_2 = arith.constant 0 : index
    %1 = vector.load %arg2[%c0_1, %c0_2] : memref<16x64xbf16, #tpu.memory_space<vmem>>, vector<16x64xbf16>
    %2 = arith.truncf %0 : vector<8x16xf32> to vector<8x16xbf16>
    %cst = arith.constant dense<0.000000e+00> : vector<8x64xf32>
    %3 = tpu.matmul %2, %1, %cst {dimension_numbers = #tpu.dot_dimension_numbers<[1], [0], [0], [1], [0, 0, 1, 1], [], []>} : vector<8x16xbf16>, vector<16x64xbf16>, vector<8x64xf32> -> vector<8x64xf32>
    %c0_3 = arith.constant 0 : index
    %c0_4 = arith.constant 0 : index
    %4 = vector.load %arg3[%c0_3, %c0_4] : memref<1x64xf32, #tpu.memory_space<vmem>>, vector<1x64xf32>
    %5 = vector.broadcast %4 : vector<1x64xf32> to vector<8x64xf32>
    %6 = arith.addf %3, %5 : vector<8x64xf32>
    %cst_5 = arith.constant 0.000000e+00 : f32
    %7 = vector.broadcast %cst_5 : f32 to vector<8x64xf32>
    %8 = arith.maximumf %6, %7 : vector<8x64xf32>
    %c0_6 = arith.constant 0 : index
    %c0_7 = arith.constant 0 : index
    %9 = vector.load %arg4[%c0_6, %c0_7] : memref<64x32xbf16, #tpu.memory_space<vmem>>, vector<64x32xbf16>
    %10 = arith.truncf %8 : vector<8x64xf32> to vector<8x64xbf16>
    %cst_8 = arith.constant dense<0.000000e+00> : vector<8x32xf32>
    %11 = tpu.matmul %10, %9, %cst_8 {dimension_numbers = #tpu.dot_dimension_numbers<[1], [0], [0], [1], [0, 0, 1, 1], [], []>} : vector<8x64xbf16>, vector<64x32xbf16>, vector<8x32xf32> -> vector<8x32xf32>
    %c0_9 = arith.constant 0 : index
    %c0_10 = arith.constant 0 : index
    %12 = vector.load %arg5[%c0_9, %c0_10] : memref<1x32xf32, #tpu.memory_space<vmem>>, vector<1x32xf32>
    %13 = vector.broadcast %12 : vector<1x32xf32> to vector<8x32xf32>
    %14 = arith.addf %11, %13 : vector<8x32xf32>
    %cst_11 = arith.constant 0.000000e+00 : f32
    %15 = vector.broadcast %cst_11 : f32 to vector<8x32xf32>
    %16 = arith.maximumf %14, %15 : vector<8x32xf32>
    %c0_12 = arith.constant 0 : index
    %c0_13 = arith.constant 0 : index
    %17 = vector.load %arg6[%c0_12, %c0_13] : memref<32x32xbf16, #tpu.memory_space<vmem>>, vector<32x32xbf16>
    %18 = arith.truncf %16 : vector<8x32xf32> to vector<8x32xbf16>
    %cst_14 = arith.constant dense<0.000000e+00> : vector<8x32xf32>
    %19 = tpu.matmul %18, %17, %cst_14 {dimension_numbers = #tpu.dot_dimension_numbers<[1], [0], [0], [1], [0, 0, 1, 1], [], []>} : vector<8x32xbf16>, vector<32x32xbf16>, vector<8x32xf32> -> vector<8x32xf32>
    %c0_15 = arith.constant 0 : index
    %c0_16 = arith.constant 0 : index
    %20 = vector.load %arg7[%c0_15, %c0_16] : memref<1x32xf32, #tpu.memory_space<vmem>>, vector<1x32xf32>
    %21 = vector.broadcast %20 : vector<1x32xf32> to vector<8x32xf32>
    %22 = arith.addf %19, %21 : vector<8x32xf32>
    %cst_17 = arith.constant 0.000000e+00 : f32
    %23 = vector.broadcast %cst_17 : f32 to vector<8x32xf32>
    %24 = arith.maximumf %22, %23 : vector<8x32xf32>
    %c0_18 = arith.constant 0 : index
    %c0_19 = arith.constant 0 : index
    %25 = vector.load %arg8[%c0_18, %c0_19] : memref<32x32xbf16, #tpu.memory_space<vmem>>, vector<32x32xbf16>
    %26 = arith.truncf %24 : vector<8x32xf32> to vector<8x32xbf16>
    %cst_20 = arith.constant dense<0.000000e+00> : vector<8x32xf32>
    %27 = tpu.matmul %26, %25, %cst_20 {dimension_numbers = #tpu.dot_dimension_numbers<[1], [0], [0], [1], [0, 0, 1, 1], [], []>} : vector<8x32xbf16>, vector<32x32xbf16>, vector<8x32xf32> -> vector<8x32xf32>
    %c0_21 = arith.constant 0 : index
    %c0_22 = arith.constant 0 : index
    %28 = vector.load %arg9[%c0_21, %c0_22] : memref<1x32xf32, #tpu.memory_space<vmem>>, vector<1x32xf32>
    %29 = vector.broadcast %28 : vector<1x32xf32> to vector<8x32xf32>
    %30 = arith.addf %27, %29 : vector<8x32xf32>
    %cst_23 = arith.constant 0.000000e+00 : f32
    %31 = vector.broadcast %cst_23 : f32 to vector<8x32xf32>
    %32 = arith.maximumf %30, %31 : vector<8x32xf32>
    %c0_24 = arith.constant 0 : index
    %c0_25 = arith.constant 0 : index
    %33 = vector.load %arg10[%c0_24, %c0_25] : memref<32x8xbf16, #tpu.memory_space<vmem>>, vector<32x8xbf16>
    %34 = arith.truncf %32 : vector<8x32xf32> to vector<8x32xbf16>
    %cst_26 = arith.constant dense<0.000000e+00> : vector<8x8xf32>
    %35 = tpu.matmul %34, %33, %cst_26 {dimension_numbers = #tpu.dot_dimension_numbers<[1], [0], [0], [1], [0, 0, 1, 1], [], []>} : vector<8x32xbf16>, vector<32x8xbf16>, vector<8x8xf32> -> vector<8x8xf32>
    %c0_27 = arith.constant 0 : index
    %c0_28 = arith.constant 0 : index
    %36 = vector.load %arg11[%c0_27, %c0_28] : memref<1x8xf32, #tpu.memory_space<vmem>>, vector<1x8xf32>
    %37 = vector.broadcast %36 : vector<1x8xf32> to vector<8x8xf32>
    %38 = arith.addf %35, %37 : vector<8x8xf32>
    %c0_29 = arith.constant 0 : index
    %c0_30 = arith.constant 0 : index
    %39 = vector.load %arg12[%c0_29, %c0_30] : memref<8x8xf32, #tpu.memory_space<vmem>>, vector<8x8xf32>
    tpu.vector_store %arg12[%c0_29, %c0_30], %38 {strides = array<i32>} : memref<8x8xf32, #tpu.memory_space<vmem>>, vector<8x8xf32>,
    return
  }
  func.func @transform_0(%arg0: i32) -> (i32, i32) {
    %c0_i32 = arith.constant 0 : i32
    %c0_i32_0 = arith.constant 0 : i32
    return %arg0, %c0_i32 : i32, i32
  }
  func.func @transform_1(%arg0: i32) -> (i32, i32) {
    %c0_i32 = arith.constant 0 : i32
    %c0_i32_0 = arith.constant 0 : i32
    %c0_i32_1 = arith.constant 0 : i32
    return %c0_i32, %c0_i32_0 : i32, i32
  }
  func.func @transform_2(%arg0: i32) -> (i32, i32) {
    %c0_i32 = arith.constant 0 : i32
    %c0_i32_0 = arith.constant 0 : i32
    %c0_i32_1 = arith.constant 0 : i32
    return %c0_i32, %c0_i32_0 : i32, i32
  }
  func.func @transform_3(%arg0: i32) -> (i32, i32) {
    %c0_i32 = arith.constant 0 : i32
    %c0_i32_0 = arith.constant 0 : i32
    %c0_i32_1 = arith.constant 0 : i32
    return %c0_i32, %c0_i32_0 : i32, i32
  }
  func.func @transform_4(%arg0: i32) -> (i32, i32) {
    %c0_i32 = arith.constant 0 : i32
    %c0_i32_0 = arith.constant 0 : i32
    %c0_i32_1 = arith.constant 0 : i32
    return %c0_i32, %c0_i32_0 : i32, i32
  }
  func.func @transform_5(%arg0: i32) -> (i32, i32) {
    %c0_i32 = arith.constant 0 : i32
    %c0_i32_0 = arith.constant 0 : i32
    %c0_i32_1 = arith.constant 0 : i32
    return %c0_i32, %c0_i32_0 : i32, i32
  }
  func.func @transform_6(%arg0: i32) -> (i32, i32) {
    %c0_i32 = arith.constant 0 : i32
    %c0_i32_0 = arith.constant 0 : i32
    %c0_i32_1 = arith.constant 0 : i32
    return %c0_i32, %c0_i32_0 : i32, i32
  }
  func.func @transform_7(%arg0: i32) -> (i32, i32) {
    %c0_i32 = arith.constant 0 : i32
    %c0_i32_0 = arith.constant 0 : i32
    %c0_i32_1 = arith.constant 0 : i32
    return %c0_i32, %c0_i32_0 : i32, i32
  }
  func.func @transform_8(%arg0: i32) -> (i32, i32) {
    %c0_i32 = arith.constant 0 : i32
    %c0_i32_0 = arith.constant 0 : i32
    %c0_i32_1 = arith.constant 0 : i32
    return %c0_i32, %c0_i32_0 : i32, i32
  }
  func.func @transform_9(%arg0: i32) -> (i32, i32) {
    %c0_i32 = arith.constant 0 : i32
    %c0_i32_0 = arith.constant 0 : i32
    %c0_i32_1 = arith.constant 0 : i32
    return %c0_i32, %c0_i32_0 : i32, i32
  }
  func.func @transform_10(%arg0: i32) -> (i32, i32) {
    %c0_i32 = arith.constant 0 : i32
    %c0_i32_0 = arith.constant 0 : i32
    %c0_i32_1 = arith.constant 0 : i32
    return %c0_i32, %c0_i32_0 : i32, i32
  }
  func.func @transform_11(%arg0: i32) -> (i32, i32) {
    %c0_i32 = arith.constant 0 : i32
    %c0_i32_0 = arith.constant 0 : i32
    return %arg0, %c0_i32 : i32, i32
  }
}

</mosaic_0001>

<llo_original>
// kernel: tpu_custom_call.1
$region0: #{tpu_custom_call.1}
  #allocation0 [shape = 'u32[]', space=smem, size = 0x4, offset = 0x4, fixed_abs, tag = 'smem constant byte address 0x4 - core index']
  #allocation1 [shape = 'u32[72,128]{1,0:T(1,128)}', space=vmem, size = 0x9000, scoped, tag = 'internal scratch']
  %s0 = inlined_call_operand.vmem [shape: f32[8,16], index: 0, kind: input, shape index: {}]
  %s1 = inlined_call_operand.vmem [shape: bf16[16,64], index: 1, kind: input, shape index: {}]
  %s2 = inlined_call_operand.vmem [shape: f32[1,64], index: 2, kind: input, shape index: {}]
  %s3 = inlined_call_operand.vmem [shape: bf16[64,32], index: 3, kind: input, shape index: {}]
  %s4 = inlined_call_operand.vmem [shape: f32[1,32], index: 4, kind: input, shape index: {}]
  %s5 = inlined_call_operand.vmem [shape: bf16[32,32], index: 5, kind: input, shape index: {}]
  %s6 = inlined_call_operand.vmem [shape: f32[1,32], index: 6, kind: input, shape index: {}]
  %s7 = inlined_call_operand.vmem [shape: bf16[32,32], index: 7, kind: input, shape index: {}]
  %s8 = inlined_call_operand.vmem [shape: f32[1,32], index: 8, kind: input, shape index: {}]
  %s9 = inlined_call_operand.vmem [shape: bf16[32,8], index: 9, kind: input, shape index: {}]
  %s10 = inlined_call_operand.vmem [shape: f32[1,8], index: 10, kind: input, shape index: {}]
  %s11 = inlined_call_operand.hbm [shape: f32[8,8], index: 11, kind: output, shape index: {}]
  %s12 = sld [smem:[#allocation0]]
  $region54: #{tpu_custom_call.1} parent=0
    _
  %s14 = ssub.s32 1, %s12
  %s15 = scalar_select 0, %s14, %s12
  $region1: #{tpu_custom_call.1} parent=0
    #allocation2 [shape = 'u8[4096]{0}', space=vmem, size = 0x1000, scoped, tag = 'output window, operand 0, single buffered']
    #allocation3 [shape = 's32[1]{0}', space=sflag, size = 0x4, scoped, tag = 'scoped memory for tpu_custom_call.1']
    %16 = vsyncpa [#allocation3], 0
    // Predicated region
    $region2: #{tpu_custom_call.1} parent=1 // pred_check
      _
    $region3: #{tpu_custom_call.1} parent=1 // pred_check_branch
      %18 = sbr.rel (0) target = $region5
    $region4: #{tpu_custom_call.1} parent=1 // pred_region
      _
    $region5: #{tpu_custom_call.1} parent=1 // pred_fallthru
      _
    // Predicated region
    $region6: #{tpu_custom_call.1} parent=1 // pred_check
      _
    $region7: #{tpu_custom_call.1} parent=1 // pred_check_branch
      %20 = sbr.rel (0) target = $region9
    $region8: #{tpu_custom_call.1} parent=1 // pred_region
      _
    $region9: #{tpu_custom_call.1} parent=1 // pred_fallthru
      _
    // Predicated region
    $region10: #{tpu_custom_call.1} parent=1 // pred_check
      _
    $region11: #{tpu_custom_call.1} parent=1 // pred_check_branch
      %22 = sbr.rel (0) target = $region13
    $region12: #{tpu_custom_call.1} parent=1 // pred_region
      _
    $region13: #{tpu_custom_call.1} parent=1 // pred_fallthru
      _
    // Predicated region
    $region14: #{tpu_custom_call.1} parent=1 // pred_check
      _
    $region15: #{tpu_custom_call.1} parent=1 // pred_check_branch
      %24 = sbr.rel (0) target = $region17
    $region16: #{tpu_custom_call.1} parent=1 // pred_region
      _
    $region17: #{tpu_custom_call.1} parent=1 // pred_fallthru
      _
    // Predicated region
    $region18: #{tpu_custom_call.1} parent=1 // pred_check
      _
    $region19: #{tpu_custom_call.1} parent=1 // pred_check_branch
      %26 = sbr.rel (0) target = $region21
    $region20: #{tpu_custom_call.1} parent=1 // pred_region
      _
    $region21: #{tpu_custom_call.1} parent=1 // pred_fallthru
      _
    // Predicated region
    $region22: #{tpu_custom_call.1} parent=1 // pred_check
      _
    $region23: #{tpu_custom_call.1} parent=1 // pred_check_branch
      %28 = sbr.rel (0) target = $region25
    $region24: #{tpu_custom_call.1} parent=1 // pred_region
      _
    $region25: #{tpu_custom_call.1} parent=1 // pred_fallthru
      _
    // Predicated region
    $region26: #{tpu_custom_call.1} parent=1 // pred_check
      _
    $region27: #{tpu_custom_call.1} parent=1 // pred_check_branch
      %30 = sbr.rel (0) target = $region29
    $region28: #{tpu_custom_call.1} parent=1 // pred_region
      _
    $region29: #{tpu_custom_call.1} parent=1 // pred_fallthru
      _
    // Predicated region
    $region30: #{tpu_custom_call.1} parent=1 // pred_check
      _
    $region31: #{tpu_custom_call.1} parent=1 // pred_check_branch
      %32 = sbr.rel (0) target = $region33
    $region32: #{tpu_custom_call.1} parent=1 // pred_region
      _
    $region33: #{tpu_custom_call.1} parent=1 // pred_fallthru
      _
    // Predicated region
    $region34: #{tpu_custom_call.1} parent=1 // pred_check
      _
    $region35: #{tpu_custom_call.1} parent=1 // pred_check_branch
      %34 = sbr.rel (0) target = $region37
    $region36: #{tpu_custom_call.1} parent=1 // pred_region
      _
    $region37: #{tpu_custom_call.1} parent=1 // pred_fallthru
      _
    // Predicated region
    $region38: #{tpu_custom_call.1} parent=1 // pred_check
      _
    $region39: #{tpu_custom_call.1} parent=1 // pred_check_branch
      %36 = sbr.rel (0) target = $region41
    $region40: #{tpu_custom_call.1} parent=1 // pred_region
      _
    $region41: #{tpu_custom_call.1} parent=1 // pred_fallthru
      _
    // Predicated region
    $region42: #{tpu_custom_call.1} parent=1 // pred_check
      _
    $region43: #{tpu_custom_call.1} parent=1 // pred_check_branch
      %38 = sbr.rel (0) target = $region45
    $region44: #{tpu_custom_call.1} parent=1 // pred_region
      _
    $region45: #{tpu_custom_call.1} parent=1 // pred_fallthru
      _
    %v40 = vld [vmem:[%s0] sm:$0xff]
    %v41 = vld [vmem:[%s1] sm:$0xf]
    %v42 = vld [vmem:[%s1 + $0x4] sm:$0xf]
    %v43 = vpack.c.bf16 %v40, %v40
    %v44 = vld [vmem:[%s2] sm:$0x1]
    %v46 = vperm.slane %v44, 0
    %v50 = vunpack.c.l.b16 %v41
    %v51 = vunpack.c.l.b16 %v42
    %v52 = vpack.c.b16 %v51, %v50
    %vm54 = vcmask 130048
    %v56 = vsel %vm54, %v43, 0
    %58 = vmatpush.bf16.msra.mxu0 0
    %59 = vmatpush.bf16.msra.mxu0 0
    %60 = vmatpush.bf16.msra.mxu0 0
    %61 = vmatpush.bf16.msra.mxu0 0
    %62 = vmatpush.bf16.msra.mxu0 0
    %63 = vmatpush.bf16.msra.mxu0 0
    %64 = vmatpush.bf16.msra.mxu0 0
    %65 = vmatpush.bf16.msra.mxu0 %v52
    %66 = vmatmul.bf16.gmra.mxu0 %v56
    %v67 = vpop.f32.mrf.mxu0
    %v68 = vadd.f32 %v46, %v67
    %v69 = vpop.f32.mrf.mxu0
    %70 = vdwg.mxu0
    %v71 = vmax.f32 %v68, 0.0
    %v72 = vld [vmem:[%s3] sm:$0xf]
    %v73 = vld [vmem:[%s3 + $0x4] sm:$0xf]
    %v74 = vld [vmem:[%s3 + $0x8] sm:$0xf]
    %v75 = vld [vmem:[%s3 + $0xc] sm:$0xf]
    %v76 = vld [vmem:[%s3 + $0x10] sm:$0xf]
    %v77 = vld [vmem:[%s3 + $0x14] sm:$0xf]
    %v78 = vld [vmem:[%s3 + $0x18] sm:$0xf]
    %v79 = vld [vmem:[%s3 + $0x1c] sm:$0xf]
    %v80 = vpack.c.bf16 %v71, %v71
    %v81 = vld [vmem:[%s4] sm:$0x1]
    %v83 = vperm.slane %v81, 0
    %v93 = vunpack.c.l.b16 %v72
    %v94 = vunpack.c.l.b16 %v73
    %v95 = vunpack.c.l.b16 %v74
    %v96 = vunpack.c.l.b16 %v75
    %v97 = vunpack.c.l.b16 %v76
    %v98 = vunpack.c.l.b16 %v77
    %v99 = vunpack.c.l.b16 %v78
    %v100 = vunpack.c.l.b16 %v79
    %v101 = vpack.c.b16 %v94, %v93
    %v102 = vpack.c.b16 %v96, %v95
    %v103 = vpack.c.b16 %v98, %v97
    %v104 = vpack.c.b16 %v100, %v99
    %vm109 = vcmask 523264
    %v111 = vsel %vm109, %v80, 0
    %113 = vmatpush.bf16.msra.mxu0 0
    %114 = vmatpush.bf16.msra.mxu0 0
    %115 = vmatpush.bf16.msra.mxu0 0
    %116 = vmatpush.bf16.msra.mxu0 0
    %117 = vmatpush.bf16.msra.mxu0 %v104
    %118 = vmatpush.bf16.msra.mxu0 %v103
    %119 = vmatpush.bf16.msra.mxu0 %v102
    %120 = vmatpush.bf16.msra.mxu0 %v101
    %121 = vmatmul.bf16.gmra.mxu0 %v111
    %v122 = vpop.f32.mrf.mxu0
    %v123 = vadd.f32 %v83, %v122
    %v124 = vpop.f32.mrf.mxu0
    %125 = vdwg.mxu0
    %v126 = vmax.f32 %v123, 0.0
    %v127 = vld [vmem:[%s5] sm:$0xf]
    %v128 = vld [vmem:[%s5 + $0x4] sm:$0xf]
    %v129 = vld [vmem:[%s5 + $0x8] sm:$0xf]
    %v130 = vld [vmem:[%s5 + $0xc] sm:$0xf]
    %v131 = vpack.c.bf16 %v126, %v126
    %v132 = vld [vmem:[%s6] sm:$0x1]
    %v134 = vperm.slane %v132, 0
    %v140 = vunpack.c.l.b16 %v127
    %v141 = vunpack.c.l.b16 %v128
    %v142 = vunpack.c.l.b16 %v129
    %v143 = vunpack.c.l.b16 %v130
    %v144 = vpack.c.b16 %v141, %v140
    %v145 = vpack.c.b16 %v143, %v142
    %vm148 = vcmask 261120
    %v150 = vsel %vm148, %v131, 0
    %152 = vmatpush.bf16.msra.mxu0 0
    %153 = vmatpush.bf16.msra.mxu0 0
    %154 = vmatpush.bf16.msra.mxu0 0
    %155 = vmatpush.bf16.msra.mxu0 0
    %156 = vmatpush.bf16.msra.mxu0 0
    %157 = vmatpush.bf16.msra.mxu0 0
    %158 = vmatpush.bf16.msra.mxu0 %v145
    %159 = vmatpush.bf16.msra.mxu0 %v144
    %160 = vmatmul.bf16.gmra.mxu0 %v150
    %v161 = vpop.f32.mrf.mxu0
    %v162 = vadd.f32 %v134, %v161
    %v163 = vpop.f32.mrf.mxu0
    %164 = vdwg.mxu0
    %v165 = vmax.f32 %v162, 0.0
    %v166 = vld [vmem:[%s7] sm:$0xf]
    %v167 = vld [vmem:[%s7 + $0x4] sm:$0xf]
    %v168 = vld [vmem:[%s7 + $0x8] sm:$0xf]
    %v169 = vld [vmem:[%s7 + $0xc] sm:$0xf]
    %v170 = vpack.c.bf16 %v165, %v165
    %v171 = vld [vmem:[%s8] sm:$0x1]
    %v173 = vperm.slane %v171, 0
    %v179 = vunpack.c.l.b16 %v166
    %v180 = vunpack.c.l.b16 %v167
    %v181 = vunpack.c.l.b16 %v168
    %v182 = vunpack.c.l.b16 %v169
    %v183 = vpack.c.b16 %v180, %v179
    %v184 = vpack.c.b16 %v182, %v181
    %v188 = vsel %vm148, %v170, 0
    %190 = vmatpush.bf16.msra.mxu0 0
    %191 = vmatpush.bf16.msra.mxu0 0
    %192 = vmatpush.bf16.msra.mxu0 0
    %193 = vmatpush.bf16.msra.mxu0 0
    %194 = vmatpush.bf16.msra.mxu0 0
    %195 = vmatpush.bf16.msra.mxu0 0
    %196 = vmatpush.bf16.msra.mxu0 %v184
    %197 = vmatpush.bf16.msra.mxu0 %v183
    %198 = vmatmul.bf16.gmra.mxu0 %v188
    %v199 = vpop.f32.mrf.mxu0
    %v200 = vadd.f32 %v173, %v199
    %v201 = vpop.f32.mrf.mxu0
    %202 = vdwg.mxu0
    %v203 = vmax.f32 %v200, 0.0
    %v204 = vld [vmem:[%s9] sm:$0xf]
    %v205 = vld [vmem:[%s9 + $0x4] sm:$0xf]
    %v206 = vld [vmem:[%s9 + $0x8] sm:$0xf]
    %v207 = vld [vmem:[%s9 + $0xc] sm:$0xf]
    %v208 = vpack.c.bf16 %v203, %v203
    %v209 = vld [vmem:[%s10] sm:$0x1]
    %v211 = vperm.slane %v209, 0
    %v217 = vunpack.c.l.b16 %v204
    %v218 = vunpack.c.l.b16 %v205
    %v219 = vunpack.c.l.b16 %v206
    %v220 = vunpack.c.l.b16 %v207
    %v221 = vpack.c.b16 %v218, %v217
    %v222 = vpack.c.b16 %v220, %v219
    %v226 = vsel %vm148, %v208, 0
    %228 = vmatpush.bf16.msra.mxu0 0
    %229 = vmatpush.bf16.msra.mxu0 0
    %230 = vmatpush.bf16.msra.mxu0 0
    %231 = vmatpush.bf16.msra.mxu0 0
    %232 = vmatpush.bf16.msra.mxu0 0
    %233 = vmatpush.bf16.msra.mxu0 0
    %234 = vmatpush.bf16.msra.mxu0 %v222
    %235 = vmatpush.bf16.msra.mxu0 %v221
    %236 = vmatmul.bf16.gmra.mxu0 %v226
    %v237 = vpop.f32.mrf.mxu0
    %v238 = vadd.f32 %v211, %v237
    %v239 = vpop.f32.mrf.mxu0
    %240 = vdwg.mxu0
    %vm241 = vcmask 64512
    %242 = vst.msk [vmem:[#allocation2] sm:$0xff] %vm241, %v238
    // Predicated region
    $region46: #{tpu_custom_call.1} parent=1 // pred_check
      _
    $region47: #{tpu_custom_call.1} parent=1 // pred_check_branch
      %244 = sbr.rel (0) target = $region49
    $region48: #{tpu_custom_call.1} parent=1 // pred_region
      %246 = vsyncadd [#allocation3], 0
      %s248 = sshll.u32 [#allocation2], 4
      %s249 = int_to_ptr.vmem [resolvable:$true] %s248
      %s250 = sshll.u32 %s11, 4
      %s251 = int_to_ptr.hbm [resolvable:$true] %s250
      %253 = dma.vmem_to_hbm [thread:$0]  %s249, 128, %s251, [#allocation3]
    $region49: #{tpu_custom_call.1} parent=1 // pred_fallthru
      _
    // Predicated region
    $region50: #{tpu_custom_call.1} parent=1 // pred_check
      _
    $region51: #{tpu_custom_call.1} parent=1 // pred_check_branch
      %255 = sbr.rel (0) target = $region53
    $region52: #{tpu_custom_call.1} parent=1 // pred_region
      %257 = dma.done [#allocation3], 128
    $region53: #{tpu_custom_call.1} parent=1 // pred_fallthru
      _
    %258 = vsyncpa [#allocation3], 1

</llo_original>
